<compile_context>
chip_gen: v7x
topology: tpu7x:2x2x1
jax: 0.10.0
libtpu: 0.0.40
codegen_flags: <defaults>
</compile_context>

<pallas_src>
import math

import jax
import jax.numpy as jnp
from jax import lax
from jax.experimental import pallas as pl
from jax.experimental.pallas import tpu as pltpu

NUM_CLASSES = 3          # len(LABEL_MAPPING)
PROJECTION_DIM = 128
TEXT_EMBEDDING_DIM = 32  # synthetic small hidden size
LAMBDA_CONTRAST = 0.1
SLAB_WIDTH = 128         # lane-dense output width (logits padded to 128 lanes)


def tl_kernel(hidden_ref, pool_ref, onehot_ref, wp_ref, bp_ref, wc_ref, bc_ref,
              proj_ref, slab_ref):
    hidden2d = hidden_ref[...]                    # (B*S, D) f32
    pool_mat = pool_ref[...]                      # (B, B*S) f32, precomputed 1/S mask
    onehot = onehot_ref[...]                      # (B, 128) f32, zero-padded one-hot

    # ---- mean pool over sequence on the MXU (vmatmul slot is idle here) -----
    pooled = jnp.dot(pool_mat, hidden2d,
                     preferred_element_type=jnp.float32)        # (B, D)
    B = pooled.shape[0]

    # ---- projection + ReLU ---------------------------------------------------
    proj = jnp.dot(pooled, wp_ref[...],
                   preferred_element_type=jnp.float32) + bp_ref[...]   # (B, P)
    proj = jnp.maximum(proj, 0.0)
    proj_ref[...] = proj
    P = proj.shape[1]

    # ---- classifier (lane-dense: weights zero-padded to 128 output columns) --
    logits_pad = jnp.dot(proj, wc_ref[...],
                         preferred_element_type=jnp.float32) + bc_ref[...]  # (B, 128)
    W = logits_pad.shape[1]

    # ---- cross entropy (mean over batch, no class weights) -------------------
    # padded lanes hold exact 0; mask them out of the max / logsumexp
    lane = lax.broadcasted_iota(jnp.int32, (B, W), 1)
    valid = lane < NUM_CLASSES
    m = jnp.max(jnp.where(valid, logits_pad, jnp.float32(-1e30)),
                axis=-1, keepdims=True)                         # (B, 1)
    exps = jnp.where(valid, jnp.exp(logits_pad - m), 0.0)
    lse = jnp.log(jnp.sum(exps, axis=-1, keepdims=True))
    logp = logits_pad - m - lse                                 # finite everywhere
    ce = -jnp.sum(onehot * logp, keepdims=True) / float(B)      # (1, 1)

    # ---- batch-hard soft-margin triplet loss on projected embeddings ---------
    # pairwise (non-squared) euclidean distances, sentence-transformers style
    gram = lax.dot_general(proj, proj, (((1,), (1,)), ((), ())),
                           preferred_element_type=jnp.float32)  # (B, B) = proj @ proj.T
    psq = proj * proj
    sq_col = jnp.sum(psq, axis=1, keepdims=True)                # (B, 1)  ||x_i||^2
    ones_1p = jnp.ones((1, P), jnp.float32)
    sq_row = lax.dot_general(ones_1p, psq, (((1,), (1,)), ((), ())),
                             preferred_element_type=jnp.float32)  # (1, B) ||x_j||^2
    d2 = jnp.maximum(sq_row - 2.0 * gram + sq_col, 0.0)
    zero_mask = (d2 == 0.0).astype(jnp.float32)
    dist = jnp.sqrt(d2 + zero_mask * 1e-16) * (1.0 - zero_mask)

    ii = lax.broadcasted_iota(jnp.int32, (B, B), 0)
    jj = lax.broadcasted_iota(jnp.int32, (B, B), 1)
    eye = (ii == jj).astype(jnp.float32)
    # same-class matrix from the (padded) one-hot: exact {0,1}, computed on the MXU
    same_f = lax.dot_general(onehot, onehot, (((1,), (1,)), ((), ())),
                             preferred_element_type=jnp.float32)  # (B, B)
    pos_mask = same_f * (1.0 - eye)
    neg_mask = 1.0 - same_f

    hardest_pos = jnp.max(pos_mask * dist, axis=1, keepdims=True)       # (B, 1)
    max_dist = jnp.max(dist, axis=1, keepdims=True)                     # (B, 1)
    hardest_neg = jnp.min(dist + max_dist * (1.0 - neg_mask),
                          axis=1, keepdims=True)                        # (B, 1)

    # numerically stable softplus (matches F.softplus)
    x = hardest_pos - hardest_neg
    softplus = jnp.maximum(x, 0.0) + jnp.log(1.0 + jnp.exp(-jnp.abs(x)))
    trip = jnp.sum(softplus, keepdims=True) / float(B)                  # (1, 1)

    loss = ce + LAMBDA_CONTRAST * trip                                  # (1, 1)

    # ---- single merged lane-dense output slab ---------------------------------
    # rows 0..B-1 : logits padded to 128 lanes   (unmasked full-width store)
    # row  B      : [loss, ce, trip, 0, ...]
    slab_ref[0:B, :] = logits_pad
    row8 = lax.broadcasted_iota(jnp.int32, (8, W), 0)
    lane8 = lax.broadcasted_iota(jnp.int32, (8, W), 1)
    top = row8 == 0
    stats8 = (jnp.where(top & (lane8 == 0), loss, 0.0)
              + jnp.where(top & (lane8 == 1), ce, 0.0)
              + jnp.where(top & (lane8 == 2), trip, 0.0))
    slab_ref[B:B + 8, :] = stats8


def tl_model_forward(last_hidden_state, labels, wp, bp, wc, bc):
    """last_hidden_state: (B, S, D) f32, labels: (B,) int32."""
    B, S, D = last_hidden_state.shape
    P = wp.shape[1]
    C = wc.shape[1]
    W = SLAB_WIDTH

    hidden2d = last_hidden_state.reshape(B * S, D)    # free contiguous reshape

    # host/XLA-side precompute (removes in-kernel int divide / iota filler):
    pool_mat = jnp.repeat(jnp.eye(B, dtype=jnp.float32), S, axis=1) / float(S)  # (B, B*S)
    onehot_pad = jax.nn.one_hot(labels, W, dtype=jnp.float32)                   # (B, 128)
    wc_pad = jnp.zeros((P, W), jnp.float32).at[:, :C].set(wc)                   # lane-dense
    bc_pad = jnp.zeros((1, W), jnp.float32).at[:, :C].set(bc)

    vmem = pl.BlockSpec(memory_space=pltpu.VMEM)
    out_shapes = (
        jax.ShapeDtypeStruct((B, P), jnp.float32),        # projected embedding (8,128)
        jax.ShapeDtypeStruct((B + 8, W), jnp.float32),    # merged slab: logits + stats
    )

    projected, slab = pl.pallas_call(
        tl_kernel,
        out_shape=out_shapes,
        in_specs=[vmem] * 7,
        out_specs=tuple([vmem] * 2),
    )(hidden2d, pool_mat, onehot_pad, wp, bp, wc_pad, bc_pad)

    return {
        "logits": slab[:B, :C],
        "fused_embedding": projected,
        "loss": slab[B, 0],
        "cross_entropy_loss": slab[B, 1],
        "contrastive_loss": slab[B, 2],
    }


def _reference_forward(last_hidden_state, labels, wp, bp, wc, bc):
    """Pure-JAX reference of the same forward (for a correctness check)."""
    B = last_hidden_state.shape[0]
    pooled = jnp.mean(last_hidden_state, axis=1)
    proj = jax.nn.relu(pooled @ wp + bp)
    logits = proj @ wc + bc
    logp = jax.nn.log_softmax(logits, axis=-1)
    ce = -jnp.mean(logp[jnp.arange(B), labels])

    gram = proj @ proj.T
    sq = jnp.sum(proj * proj, axis=1)
    d2 = jnp.maximum(sq[None, :] - 2.0 * gram + sq[:, None], 0.0)
    zm = (d2 == 0.0)
    dist = jnp.sqrt(jnp.where(zm, 1e-16, d2)) * (~zm).astype(jnp.float32)

    same = labels[:, None] == labels[None, :]
    eye = jnp.eye(B, dtype=bool)
    pos_mask = (same & ~eye).astype(jnp.float32)
    neg_mask = (~same).astype(jnp.float32)

    hardest_pos = jnp.max(pos_mask * dist, axis=1)
    max_dist = jnp.max(dist, axis=1)
    hardest_neg = jnp.min(dist + max_dist[:, None] * (1.0 - neg_mask), axis=1)
    trip = jnp.mean(jax.nn.softplus(hardest_pos - hardest_neg))
    loss = ce + LAMBDA_CONTRAST * trip
    return {
        "logits": logits,
        "fused_embedding": proj,
        "loss": loss,
        "cross_entropy_loss": ce,
        "contrastive_loss": trip,
    }


def _linear_init(key, fan_in, fan_out):
    # matches torch.nn.Linear default: U(-1/sqrt(fan_in), 1/sqrt(fan_in))
    kw, kb = jax.random.split(key)
    bound = 1.0 / math.sqrt(fan_in)
    w = jax.random.uniform(kw, (fan_in, fan_out), jnp.float32, -bound, bound)
    b = jax.random.uniform(kb, (1, fan_out), jnp.float32, -bound, bound)
    return w, b


if __name__ == "__main__":
    key = jax.random.PRNGKey(0)
    k_hid, k_proj, k_cls = jax.random.split(key, 3)

    B, S, D = 8, 8, TEXT_EMBEDDING_DIM

    # synthetic encoder output (last_hidden_state) and labels
    last_hidden_state = jax.random.normal(k_hid, (B, S, D), jnp.float32)
    labels = jnp.array([0, 1, 2, 0, 1, 2, 0, 1], dtype=jnp.int32)

    wp, bp = _linear_init(k_proj, D, PROJECTION_DIM)           # text_projection
    wc, bc = _linear_init(k_cls, PROJECTION_DIM, NUM_CLASSES)  # classifier

    out = tl_model_forward(last_hidden_state, labels, wp, bp, wc, bc)
    jax.block_until_ready(out)

    ref = _reference_forward(last_hidden_state, labels, wp, bp, wc, bc)

    assert out["logits"].shape == (B, NUM_CLASSES)
    assert out["fused_embedding"].shape == (B, PROJECTION_DIM)
    assert bool(jnp.isfinite(out["loss"]))
    assert bool(jnp.isfinite(out["cross_entropy_loss"]))
    assert bool(jnp.isfinite(out["contrastive_loss"]))
    assert bool(jnp.allclose(out["logits"], ref["logits"], atol=1e-3, rtol=1e-3))
    assert bool(jnp.allclose(out["fused_embedding"], ref["fused_embedding"],
                             atol=1e-3, rtol=1e-3))
    assert bool(jnp.allclose(out["loss"], ref["loss"], atol=1e-3, rtol=1e-3))
    assert bool(jnp.allclose(out["cross_entropy_loss"], ref["cross_entropy_loss"],
                             atol=1e-3, rtol=1e-3))
    assert bool(jnp.allclose(out["contrastive_loss"], ref["contrastive_loss"],
                             atol=1e-3, rtol=1e-3))

    print("KERNEL_OK")
</pallas_src>

<mosaic_0001>
module attributes {stable_mosaic.version = 11 : i64} {
  func.func @tl_kernel(%arg0: memref<64x32xf32, #tpu.memory_space<vmem>>, %arg1: memref<8x64xf32, #tpu.memory_space<vmem>>, %arg2: memref<8x128xf32, #tpu.memory_space<vmem>>, %arg3: memref<32x128xf32, #tpu.memory_space<vmem>>, %arg4: memref<1x128xf32, #tpu.memory_space<vmem>>, %arg5: memref<128x128xf32, #tpu.memory_space<vmem>>, %arg6: memref<1x128xf32, #tpu.memory_space<vmem>>, %arg7: memref<8x128xf32, #tpu.memory_space<vmem>>, %arg8: memref<16x128xf32, #tpu.memory_space<vmem>>) attributes {dimension_semantics = [], scalar_prefetch = 0 : i64, scratch_operands = 0 : i64, tpu.core_type = #tpu.core_type<tc>} {
    %c0 = arith.constant 0 : index
    %c0_0 = arith.constant 0 : index
    %0 = vector.load %arg0[%c0, %c0_0] : memref<64x32xf32, #tpu.memory_space<vmem>>, vector<64x32xf32>
    %c0_1 = arith.constant 0 : index
    %c0_2 = arith.constant 0 : index
    %1 = vector.load %arg1[%c0_1, %c0_2] : memref<8x64xf32, #tpu.memory_space<vmem>>, vector<8x64xf32>
    %c0_3 = arith.constant 0 : index
    %c0_4 = arith.constant 0 : index
    %2 = vector.load %arg2[%c0_3, %c0_4] : memref<8x128xf32, #tpu.memory_space<vmem>>, vector<8x128xf32>
    %cst = arith.constant dense<0.000000e+00> : vector<8x32xf32>
    %3 = tpu.matmul %1, %0, %cst {dimension_numbers = #tpu.dot_dimension_numbers<[1], [0], [0], [1], [0, 0, 1, 1], [], []>} : vector<8x64xf32>, vector<64x32xf32>, vector<8x32xf32> -> vector<8x32xf32>
    %c0_5 = arith.constant 0 : index
    %c0_6 = arith.constant 0 : index
    %4 = vector.load %arg3[%c0_5, %c0_6] : memref<32x128xf32, #tpu.memory_space<vmem>>, vector<32x128xf32>
    %cst_7 = arith.constant dense<0.000000e+00> : vector<8x128xf32>
    %5 = tpu.matmul %3, %4, %cst_7 {dimension_numbers = #tpu.dot_dimension_numbers<[1], [0], [0], [1], [0, 0, 1, 1], [], []>} : vector<8x32xf32>, vector<32x128xf32>, vector<8x128xf32> -> vector<8x128xf32>
    %c0_8 = arith.constant 0 : index
    %c0_9 = arith.constant 0 : index
    %6 = vector.load %arg4[%c0_8, %c0_9] : memref<1x128xf32, #tpu.memory_space<vmem>>, vector<1x128xf32>
    %7 = vector.broadcast %6 : vector<1x128xf32> to vector<8x128xf32>
    %8 = arith.addf %5, %7 : vector<8x128xf32>
    %cst_10 = arith.constant 0.000000e+00 : f32
    %9 = vector.broadcast %cst_10 : f32 to vector<8x128xf32>
    %10 = arith.maximumf %8, %9 : vector<8x128xf32>
    %c0_11 = arith.constant 0 : index
    %c0_12 = arith.constant 0 : index
    %11 = vector.load %arg7[%c0_11, %c0_12] : memref<8x128xf32, #tpu.memory_space<vmem>>, vector<8x128xf32>
    tpu.vector_store %arg7[%c0_11, %c0_12], %10 {strides = array<i32>} : memref<8x128xf32, #tpu.memory_space<vmem>>, vector<8x128xf32>,
    %c0_13 = arith.constant 0 : index
    %c0_14 = arith.constant 0 : index
    %12 = vector.load %arg5[%c0_13, %c0_14] : memref<128x128xf32, #tpu.memory_space<vmem>>, vector<128x128xf32>
    %cst_15 = arith.constant dense<0.000000e+00> : vector<8x128xf32>
    %13 = tpu.matmul %10, %12, %cst_15 {dimension_numbers = #tpu.dot_dimension_numbers<[1], [0], [0], [1], [0, 0, 1, 1], [], []>} : vector<8x128xf32>, vector<128x128xf32>, vector<8x128xf32> -> vector<8x128xf32>
    %c0_16 = arith.constant 0 : index
    %c0_17 = arith.constant 0 : index
    %14 = vector.load %arg6[%c0_16, %c0_17] : memref<1x128xf32, #tpu.memory_space<vmem>>, vector<1x128xf32>
    %15 = vector.broadcast %14 : vector<1x128xf32> to vector<8x128xf32>
    %16 = arith.addf %13, %15 : vector<8x128xf32>
    %17 = tpu.iota {dimensions = array<i32: 1>} : vector<8x128xi32>
    %c3_i32 = arith.constant 3 : i32
    %18 = vector.broadcast %c3_i32 : i32 to vector<8x128xi32>
    %19 = arith.cmpi slt, %17, %18 : vector<8x128xi32>
    %cst_18 = arith.constant -1.000000e+30 : f32
    %20 = vector.broadcast %cst_18 : f32 to vector<8x128xf32>
    %21 = arith.select %19, %16, %20 : vector<8x128xi1>, vector<8x128xf32>
    %cst_19 = arith.constant dense<0xFF800000> : vector<8xf32>
    %22 = vector.multi_reduction <maximumf>, %21, %cst_19 [1] : vector<8x128xf32> to vector<8xf32>
    %23 = vector.shape_cast %22 : vector<8xf32> to vector<8x1xf32>
    %24 = vector.broadcast %23 : vector<8x1xf32> to vector<8x128xf32>
    %25 = arith.subf %16, %24 : vector<8x128xf32>
    %26 = math.exp %25 : vector<8x128xf32>
    %cst_20 = arith.constant 0.000000e+00 : f32
    %27 = vector.broadcast %cst_20 : f32 to vector<8x128xf32>
    %28 = arith.select %19, %26, %27 : vector<8x128xi1>, vector<8x128xf32>
    %cst_21 = arith.constant dense<0.000000e+00> : vector<8xf32>
    %29 = vector.multi_reduction <add>, %28, %cst_21 [1] : vector<8x128xf32> to vector<8xf32>
    %30 = vector.shape_cast %29 : vector<8xf32> to vector<8x1xf32>
    %31 = math.log %30 : vector<8x1xf32>
    %32 = vector.broadcast %23 : vector<8x1xf32> to vector<8x128xf32>
    %33 = arith.subf %16, %32 : vector<8x128xf32>
    %34 = vector.broadcast %31 : vector<8x1xf32> to vector<8x128xf32>
    %35 = arith.subf %33, %34 : vector<8x128xf32>
    %36 = arith.mulf %2, %35 : vector<8x128xf32>
    %37 = vector.shape_cast %36 : vector<8x128xf32> to vector<1x8x128xf32>
    %cst_22 = arith.constant dense<0.000000e+00> : vector<1xf32>
    %38 = vector.multi_reduction <add>, %37, %cst_22 [1, 2] : vector<1x8x128xf32> to vector<1xf32>
    %39 = vector.shape_cast %38 : vector<1xf32> to vector<1x1x1xf32>
    %40 = vector.extract %39[0, 0, 0] : f32 from vector<1x1x1xf32>
    %41 = vector.broadcast %40 : f32 to vector<1x1xf32>
    %cst_23 = arith.constant 0.000000e+00 : f32
    %42 = vector.broadcast %cst_23 : f32 to vector<1x1xf32>
    %43 = arith.subf %42, %41 : vector<1x1xf32>
    %cst_24 = arith.constant 8.000000e+00 : f32
    %44 = vector.broadcast %cst_24 : f32 to vector<1x1xf32>
    %45 = arith.divf %43, %44 : vector<1x1xf32>
    %cst_25 = arith.constant dense<0.000000e+00> : vector<8x8xf32>
    %46 = tpu.matmul %10, %10, %cst_25 {dimension_numbers = #tpu.dot_dimension_numbers<[1], [1], [0], [0], [0, 0, 1, 0], [], []>} : vector<8x128xf32>, vector<8x128xf32>, vector<8x8xf32> -> vector<8x8xf32>
    %47 = arith.mulf %10, %10 : vector<8x128xf32>
    %cst_26 = arith.constant dense<0.000000e+00> : vector<8xf32>
    %48 = vector.multi_reduction <add>, %47, %cst_26 [1] : vector<8x128xf32> to vector<8xf32>
    %49 = vector.shape_cast %48 : vector<8xf32> to vector<8x1xf32>
    %cst_27 = arith.constant 1.000000e+00 : f32
    %50 = vector.broadcast %cst_27 : f32 to vector<1x128xf32>
    %cst_28 = arith.constant dense<0.000000e+00> : vector<1x8xf32>
    %51 = tpu.matmul %50, %47, %cst_28 {dimension_numbers = #tpu.dot_dimension_numbers<[1], [1], [0], [0], [0, 0, 1, 0], [], []>} : vector<1x128xf32>, vector<8x128xf32>, vector<1x8xf32> -> vector<1x8xf32>
    %cst_29 = arith.constant 2.000000e+00 : f32
    %52 = vector.broadcast %cst_29 : f32 to vector<8x8xf32>
    %53 = arith.mulf %52, %46 : vector<8x8xf32>
    %54 = vector.broadcast %51 : vector<1x8xf32> to vector<8x8xf32>
    %55 = arith.subf %54, %53 : vector<8x8xf32>
    %56 = vector.broadcast %49 : vector<8x1xf32> to vector<8x8xf32>
    %57 = arith.addf %55, %56 : vector<8x8xf32>
    %cst_30 = arith.constant 0.000000e+00 : f32
    %58 = vector.broadcast %cst_30 : f32 to vector<8x8xf32>
    %59 = arith.maximumf %57, %58 : vector<8x8xf32>
    %cst_31 = arith.constant 0.000000e+00 : f32
    %60 = vector.broadcast %cst_31 : f32 to vector<8x8xf32>
    %61 = arith.cmpf oeq, %59, %60 : vector<8x8xf32>
    %62 = arith.extui %61 : vector<8x8xi1> to vector<8x8xi32>
    %63 = arith.sitofp %62 : vector<8x8xi32> to vector<8x8xf32>
    %cst_32 = arith.constant 1.000000e-16 : f32
    %64 = vector.broadcast %cst_32 : f32 to vector<8x8xf32>
    %65 = arith.mulf %63, %64 : vector<8x8xf32>
    %66 = arith.addf %59, %65 : vector<8x8xf32>
    %67 = math.sqrt %66 : vector<8x8xf32>
    %cst_33 = arith.constant 1.000000e+00 : f32
    %68 = vector.broadcast %cst_33 : f32 to vector<8x8xf32>
    %69 = arith.subf %68, %63 : vector<8x8xf32>
    %70 = arith.mulf %67, %69 : vector<8x8xf32>
    %71 = tpu.iota {dimensions = array<i32: 0>} : vector<8x8xi32>
    %72 = tpu.iota {dimensions = array<i32: 1>} : vector<8x8xi32>
    %73 = arith.cmpi eq, %71, %72 : vector<8x8xi32>
    %74 = arith.extui %73 : vector<8x8xi1> to vector<8x8xi32>
    %75 = arith.sitofp %74 : vector<8x8xi32> to vector<8x8xf32>
    %cst_34 = arith.constant dense<0.000000e+00> : vector<8x8xf32>
    %76 = tpu.matmul %2, %2, %cst_34 {dimension_numbers = #tpu.dot_dimension_numbers<[1], [1], [0], [0], [0, 0, 1, 0], [], []>} : vector<8x128xf32>, vector<8x128xf32>, vector<8x8xf32> -> vector<8x8xf32>
    %cst_35 = arith.constant 1.000000e+00 : f32
    %77 = vector.broadcast %cst_35 : f32 to vector<8x8xf32>
    %78 = arith.subf %77, %75 : vector<8x8xf32>
    %79 = arith.mulf %76, %78 : vector<8x8xf32>
    %cst_36 = arith.constant 1.000000e+00 : f32
    %80 = vector.broadcast %cst_36 : f32 to vector<8x8xf32>
    %81 = arith.subf %80, %76 : vector<8x8xf32>
    %82 = arith.mulf %79, %70 : vector<8x8xf32>
    %cst_37 = arith.constant dense<0xFF800000> : vector<8xf32>
    %83 = vector.multi_reduction <maximumf>, %82, %cst_37 [1] : vector<8x8xf32> to vector<8xf32>
    %84 = vector.shape_cast %83 : vector<8xf32> to vector<8x1xf32>
    %cst_38 = arith.constant dense<0xFF800000> : vector<8xf32>
    %85 = vector.multi_reduction <maximumf>, %70, %cst_38 [1] : vector<8x8xf32> to vector<8xf32>
    %86 = vector.shape_cast %85 : vector<8xf32> to vector<8x1xf32>
    %cst_39 = arith.constant 1.000000e+00 : f32
    %87 = vector.broadcast %cst_39 : f32 to vector<8x8xf32>
    %88 = arith.subf %87, %81 : vector<8x8xf32>
    %89 = vector.broadcast %86 : vector<8x1xf32> to vector<8x8xf32>
    %90 = arith.mulf %89, %88 : vector<8x8xf32>
    %91 = arith.addf %70, %90 : vector<8x8xf32>
    %cst_40 = arith.constant dense<0x7F800000> : vector<8xf32>
    %92 = vector.multi_reduction <minimumf>, %91, %cst_40 [1] : vector<8x8xf32> to vector<8xf32>
    %93 = vector.shape_cast %92 : vector<8xf32> to vector<8x1xf32>
    %94 = arith.subf %84, %93 : vector<8x1xf32>
    %cst_41 = arith.constant 0.000000e+00 : f32
    %95 = vector.broadcast %cst_41 : f32 to vector<8x1xf32>
    %96 = arith.maximumf %94, %95 : vector<8x1xf32>
    %97 = math.absf %94 : vector<8x1xf32>
    %cst_42 = arith.constant 0.000000e+00 : f32
    %98 = vector.broadcast %cst_42 : f32 to vector<8x1xf32>
    %99 = arith.subf %98, %97 : vector<8x1xf32>
    %100 = math.exp %99 : vector<8x1xf32>
    %cst_43 = arith.constant 1.000000e+00 : f32
    %101 = vector.broadcast %cst_43 : f32 to vector<8x1xf32>
    %102 = arith.addf %101, %100 : vector<8x1xf32>
    %103 = math.log %102 : vector<8x1xf32>
    %104 = arith.addf %96, %103 : vector<8x1xf32>
    %105 = vector.shape_cast %104 : vector<8x1xf32> to vector<1x8x1xf32>
    %cst_44 = arith.constant dense<0.000000e+00> : vector<1xf32>
    %106 = vector.multi_reduction <add>, %105, %cst_44 [1, 2] : vector<1x8x1xf32> to vector<1xf32>
    %107 = vector.shape_cast %106 : vector<1xf32> to vector<1x1x1xf32>
    %108 = vector.extract %107[0, 0, 0] : f32 from vector<1x1x1xf32>
    %109 = vector.broadcast %108 : f32 to vector<1x1xf32>
    %cst_45 = arith.constant 8.000000e+00 : f32
    %110 = vector.broadcast %cst_45 : f32 to vector<1x1xf32>
    %111 = arith.divf %109, %110 : vector<1x1xf32>
    %cst_46 = arith.constant 1.000000e-01 : f32
    %112 = vector.broadcast %cst_46 : f32 to vector<1x1xf32>
    %113 = arith.mulf %112, %111 : vector<1x1xf32>
    %114 = arith.addf %45, %113 : vector<1x1xf32>
    %c0_47 = arith.constant 0 : index
    %c0_48 = arith.constant 0 : index
    %115 = vector.load %arg8[%c0_47, %c0_48] : memref<16x128xf32, #tpu.memory_space<vmem>>, vector<8x128xf32>
    tpu.vector_store %arg8[%c0_47, %c0_48], %16 {strides = array<i32>} : memref<16x128xf32, #tpu.memory_space<vmem>>, vector<8x128xf32>,
    %116 = tpu.iota {dimensions = array<i32: 0>} : vector<8x128xi32>
    %117 = tpu.iota {dimensions = array<i32: 1>} : vector<8x128xi32>
    %c0_i32 = arith.constant 0 : i32
    %118 = vector.broadcast %c0_i32 : i32 to vector<8x128xi32>
    %119 = arith.cmpi eq, %116, %118 : vector<8x128xi32>
    %c0_i32_49 = arith.constant 0 : i32
    %120 = vector.broadcast %c0_i32_49 : i32 to vector<8x128xi32>
    %121 = arith.cmpi eq, %117, %120 : vector<8x128xi32>
    %122 = arith.andi %119, %121 : vector<8x128xi1>
    %cst_50 = arith.constant 0.000000e+00 : f32
    %123 = vector.shape_cast %114 : vector<1x1xf32> to vector<1x1xf32>
    %124 = vector.broadcast %123 : vector<1x1xf32> to vector<8x128xf32>
    %125 = vector.broadcast %cst_50 : f32 to vector<8x128xf32>
    %126 = arith.select %122, %124, %125 : vector<8x128xi1>, vector<8x128xf32>
    %c1_i32 = arith.constant 1 : i32
    %127 = vector.broadcast %c1_i32 : i32 to vector<8x128xi32>
    %128 = arith.cmpi eq, %117, %127 : vector<8x128xi32>
    %129 = arith.andi %119, %128 : vector<8x128xi1>
    %cst_51 = arith.constant 0.000000e+00 : f32
    %130 = vector.shape_cast %45 : vector<1x1xf32> to vector<1x1xf32>
    %131 = vector.broadcast %130 : vector<1x1xf32> to vector<8x128xf32>
    %132 = vector.broadcast %cst_51 : f32 to vector<8x128xf32>
    %133 = arith.select %129, %131, %132 : vector<8x128xi1>, vector<8x128xf32>
    %134 = arith.addf %126, %133 : vector<8x128xf32>
    %c2_i32 = arith.constant 2 : i32
    %135 = vector.broadcast %c2_i32 : i32 to vector<8x128xi32>
    %136 = arith.cmpi eq, %117, %135 : vector<8x128xi32>
    %137 = arith.andi %119, %136 : vector<8x128xi1>
    %cst_52 = arith.constant 0.000000e+00 : f32
    %138 = vector.shape_cast %111 : vector<1x1xf32> to vector<1x1xf32>
    %139 = vector.broadcast %138 : vector<1x1xf32> to vector<8x128xf32>
    %140 = vector.broadcast %cst_52 : f32 to vector<8x128xf32>
    %141 = arith.select %137, %139, %140 : vector<8x128xi1>, vector<8x128xf32>
    %142 = arith.addf %134, %141 : vector<8x128xf32>
    %c8 = arith.constant 8 : index
    %c0_53 = arith.constant 0 : index
    %143 = vector.load %arg8[%c8, %c0_53] : memref<16x128xf32, #tpu.memory_space<vmem>>, vector<8x128xf32>
    tpu.vector_store %arg8[%c8, %c0_53], %142 {strides = array<i32>} : memref<16x128xf32, #tpu.memory_space<vmem>>, vector<8x128xf32>,
    return
  }
}

</mosaic_0001>

<llo_original>
// kernel: tpu_custom_call.1
$region0: #{tpu_custom_call.1}
  #allocation0 [shape = 'u32[]', space=smem, size = 0x4, offset = 0x4, fixed_abs, tag = 'smem constant byte address 0x4 - core index']
  #allocation1 [shape = 'u32[144,128]{1,0:T(1,128)}', space=vmem, size = 0x12000, scoped, tag = 'internal scratch']
  %s0 = inlined_call_operand.vmem [shape: f32[64,32], index: 0, kind: input, shape index: {}]
  %s1 = inlined_call_operand.vmem [shape: f32[8,64], index: 1, kind: input, shape index: {}]
  %s2 = inlined_call_operand.vmem [shape: f32[8,128], index: 2, kind: input, shape index: {}]
  %s3 = inlined_call_operand.vmem [shape: f32[32,128], index: 3, kind: input, shape index: {}]
  %s4 = inlined_call_operand.vmem [shape: f32[1,128], index: 4, kind: input, shape index: {}]
  %s5 = inlined_call_operand.hbm [shape: f32[128,128], index: 5, kind: input, shape index: {}]
  %s6 = inlined_call_operand.vmem [shape: f32[1,128], index: 6, kind: input, shape index: {}]
  %s7 = inlined_call_operand.hbm [shape: f32[8,128], index: 7, kind: output, shape index: {0}]
  %s8 = inlined_call_operand.hbm [shape: f32[16,128], index: 8, kind: output, shape index: {1}]
  %9 = xla_tuple %s7, %s8
  %s10 = sld [smem:[#allocation0]]
  $region50: #{tpu_custom_call.1} parent=0
    _
  %s12 = ssub.s32 1, %s10
  %s13 = scalar_select 0, %s12, %s10
  $region1: #{tpu_custom_call.1} parent=0
    #allocation2 [shape = 'u8[65536]{0}', space=vmem, size = 0x10000, scoped, tag = 'input window, operand 5, single buffered']
    #allocation3 [shape = 's32[1]{0}', space=sflag, size = 0x4, scoped, tag = 'scoped memory for tpu_custom_call.1']
    #allocation4 [shape = 's32[1]{0}', space=sflag, size = 0x4, scoped, tag = 'scoped memory for tpu_custom_call.1']
    #allocation5 [shape = 'u8[4096]{0}', space=vmem, size = 0x1000, scoped, tag = 'output window, operand 0, single buffered']
    #allocation6 [shape = 'u8[8192]{0}', space=vmem, size = 0x2000, scoped, tag = 'output window, operand 1, single buffered']
    #allocation7 [shape = 's32[1]{0}', space=sflag, size = 0x4, scoped, tag = 'scoped memory for tpu_custom_call.1']
    %14 = vsyncpa [#allocation3], 0
    %15 = vsyncpa [#allocation4], 0
    %16 = vsyncpa [#allocation7], 0
    // Predicated region
    $region2: #{tpu_custom_call.1} parent=1 // pred_check
      _
    $region3: #{tpu_custom_call.1} parent=1 // pred_check_branch
      %18 = sbr.rel (0) target = $region5
    $region4: #{tpu_custom_call.1} parent=1 // pred_region
      _
    $region5: #{tpu_custom_call.1} parent=1 // pred_fallthru
      _
    // Predicated region
    $region6: #{tpu_custom_call.1} parent=1 // pred_check
      _
    $region7: #{tpu_custom_call.1} parent=1 // pred_check_branch
      %20 = sbr.rel (0) target = $region9
    $region8: #{tpu_custom_call.1} parent=1 // pred_region
      _
    $region9: #{tpu_custom_call.1} parent=1 // pred_fallthru
      _
    // Predicated region
    $region10: #{tpu_custom_call.1} parent=1 // pred_check
      _
    $region11: #{tpu_custom_call.1} parent=1 // pred_check_branch
      %22 = sbr.rel (0) target = $region13
    $region12: #{tpu_custom_call.1} parent=1 // pred_region
      _
    $region13: #{tpu_custom_call.1} parent=1 // pred_fallthru
      _
    // Predicated region
    $region14: #{tpu_custom_call.1} parent=1 // pred_check
      _
    $region15: #{tpu_custom_call.1} parent=1 // pred_check_branch
      %24 = sbr.rel (0) target = $region17
    $region16: #{tpu_custom_call.1} parent=1 // pred_region
      _
    $region17: #{tpu_custom_call.1} parent=1 // pred_fallthru
      _
    // Predicated region
    $region18: #{tpu_custom_call.1} parent=1 // pred_check
      _
    $region19: #{tpu_custom_call.1} parent=1 // pred_check_branch
      %26 = sbr.rel (0) target = $region21
    $region20: #{tpu_custom_call.1} parent=1 // pred_region
      _
    $region21: #{tpu_custom_call.1} parent=1 // pred_fallthru
      _
    // Predicated region
    $region22: #{tpu_custom_call.1} parent=1 // pred_check
      _
    $region23: #{tpu_custom_call.1} parent=1 // pred_check_branch
      %28 = sbr.rel (0) target = $region25
    $region24: #{tpu_custom_call.1} parent=1 // pred_region
      %s30 = ssub.s32 2048, 2048
      %31 = vsyncadd [#allocation3], %s30
      %s32 = sshll.u32 [#allocation2], 4
      %s33 = int_to_ptr.vmem [resolvable:$true] %s32
      %38 = dma.hbm_to_vmem [thread:$0]  %s5, 2048, %s33, [#allocation3], 128, 128, 8
    $region25: #{tpu_custom_call.1} parent=1 // pred_fallthru
      _
    // Predicated region
    $region26: #{tpu_custom_call.1} parent=1 // pred_check
      _
    $region27: #{tpu_custom_call.1} parent=1 // pred_check_branch
      %40 = sbr.rel (0) target = $region29
    $region28: #{tpu_custom_call.1} parent=1 // pred_region
      _
    $region29: #{tpu_custom_call.1} parent=1 // pred_fallthru
      _
    // Predicated region
    $region30: #{tpu_custom_call.1} parent=1 // pred_check
      _
    $region31: #{tpu_custom_call.1} parent=1 // pred_check_branch
      %42 = sbr.rel (0) target = $region33
    $region32: #{tpu_custom_call.1} parent=1 // pred_region
      %43 = dma.done [#allocation3], 2048
    $region33: #{tpu_custom_call.1} parent=1 // pred_fallthru
      _
    %v44 = vld [vmem:[%s0] sm:$0xff]
    %v45 = vld [vmem:[%s0 + $0x8] sm:$0xff]
    %v46 = vld [vmem:[%s0 + $0x10] sm:$0xff]
    %v47 = vld [vmem:[%s0 + $0x18] sm:$0xff]
    %v48 = vld [vmem:[%s0 + $0x20] sm:$0xff]
    %v49 = vld [vmem:[%s0 + $0x28] sm:$0xff]
    %v50 = vld [vmem:[%s0 + $0x30] sm:$0xff]
    %v51 = vld [vmem:[%s0 + $0x38] sm:$0xff]
    %v52 = vld [vmem:[%s1] sm:$0xff]
    %v53 = vld [vmem:[%s2] sm:$0xff]
    %vm54 = vcmask 523264
    %v56 = vsel %vm54, %v52, 0
    %58 = vmatprep.subr.mxu0 0.0
    %59 = vmatpush1.msra.mxu0 %v44
    %60 = vmatprep.subr.mxu0 0.0
    %61 = vmatpush1.msra.mxu0 %v45
    %62 = vmatprep.subr.mxu0 0.0
    %63 = vmatpush1.msra.mxu0 %v46
    %64 = vmatprep.subr.mxu0 0.0
    %65 = vmatpush1.msra.mxu0 %v47
    %66 = vmatprep.subr.mxu0 0.0
    %67 = vmatpush1.msra.mxu0 %v48
    %68 = vmatprep.subr.mxu0 0.0
    %69 = vmatpush1.msra.mxu0 %v49
    %70 = vmatprep.subr.mxu0 0.0
    %71 = vmatpush1.msra.mxu0 %v50
    %72 = vmatprep.subr.mxu0 0.0
    %73 = vmatpush1.msra.mxu0 %v51
    %74 = vmatprep.subr.mxu0 0.0
    %75 = vmatpush1.msra.mxu0 0.0
    %76 = vmatprep.subr.mxu0 0.0
    %77 = vmatpush1.msra.mxu0 0.0
    %78 = vmatprep.subr.mxu0 0.0
    %79 = vmatpush1.msra.mxu0 0.0
    %80 = vmatprep.subr.mxu0 0.0
    %81 = vmatpush1.msra.mxu0 0.0
    %82 = vmatprep.subr.mxu0 0.0
    %83 = vmatpush1.msra.mxu0 0.0
    %84 = vmatprep.subr.mxu0 0.0
    %85 = vmatpush1.msra.mxu0 0.0
    %86 = vmatprep.subr.mxu0 0.0
    %87 = vmatpush1.msra.mxu0 0.0
    %88 = vmatprep.subr.mxu0 0.0
    %89 = vmatpush1.msra.mxu0 0.0
    %90 = vmatprep.subr.mxu0 0.0
    %91 = vmatpush1.msra.mxu0 0.0
    %92 = vmatprep.subr.mxu0 0.0
    %93 = vmatpush1.msra.mxu0 0.0
    %94 = vmatprep.subr.mxu0 0.0
    %95 = vmatpush1.msra.mxu0 0.0
    %96 = vmatprep.subr.mxu0 0.0
    %97 = vmatpush1.msra.mxu0 0.0
    %98 = vmatprep.subr.mxu0 0.0
    %99 = vmatpush1.msra.mxu0 0.0
    %100 = vmatprep.subr.mxu0 0.0
    %101 = vmatpush1.msra.mxu0 0.0
    %102 = vmatprep.subr.mxu0 0.0
    %103 = vmatpush1.msra.mxu0 0.0
    %104 = vmatprep.subr.mxu0 0.0
    %105 = vmatpush1.msra.mxu0 0.0
    %106 = vmatprep.subr.mxu0 0.0
    %107 = vmatpush1.msra.mxu0 0.0
    %108 = vmatprep.subr.mxu0 0.0
    %109 = vmatpush1.msra.mxu0 0.0
    %110 = vmatprep.subr.mxu0 0.0
    %111 = vmatpush1.msra.mxu0 0.0
    %112 = vmatprep.subr.mxu0 0.0
    %113 = vmatpush1.msra.mxu0 0.0
    %114 = vmatprep.subr.mxu0 0.0
    %115 = vmatpush1.msra.mxu0 0.0
    %116 = vmatprep.subr.mxu0 0.0
    %117 = vmatpush1.msra.mxu0 0.0
    %118 = vmatprep.subr.mxu0 0.0
    %119 = vmatpush1.msra.mxu0 0.0
    %120 = vmatprep.subr.mxu0 0.0
    %121 = vmatpush1.msra.mxu0 0.0
    %122 = vmatprep.mubr.f32.mxu0 0.0
    %123 = vmatmul.mubr.f32.gmra.mrb[0].mxu0 %v56
    %v124 = vpop.f32.mrb[0].mxu0
    %v125 = vadd.f32 0.0, %v124
    %v126 = vpop.f32.mrb[0].mxu0
    %127 = vdwg.mxu0
    %v128 = vld [vmem:[%s3] sm:$0xff]
    %v129 = vld [vmem:[%s3 + $0x8] sm:$0xff]
    %v130 = vld [vmem:[%s3 + $0x10] sm:$0xff]
    %v131 = vld [vmem:[%s3 + $0x18] sm:$0xff]
    %v132 = vld [vmem:[%s4] sm:$0x1]
    %v134 = vlaneseq
    %v135 = vshrl.u32 %v134, 7
    %v136 = vsub.s32 0, %v135
    %v137 = vrot.slane %v132, %v136
    %vm139 = vcmask 261120
    %v141 = vsel %vm139, %v125, 0
    %143 = vmatprep.subr.mxu0 0.0
    %144 = vmatpush1.msra.mxu0 %v128
    %145 = vmatprep.subr.mxu0 0.0
    %146 = vmatpush1.msra.mxu0 %v129
    %147 = vmatprep.subr.mxu0 0.0
    %148 = vmatpush1.msra.mxu0 %v130
    %149 = vmatprep.subr.mxu0 0.0
    %150 = vmatpush1.msra.mxu0 %v131
    %151 = vmatprep.subr.mxu0 0.0
    %152 = vmatpush1.msra.mxu0 0.0
    %153 = vmatprep.subr.mxu0 0.0
    %154 = vmatpush1.msra.mxu0 0.0
    %155 = vmatprep.subr.mxu0 0.0
    %156 = vmatpush1.msra.mxu0 0.0
    %157 = vmatprep.subr.mxu0 0.0
    %158 = vmatpush1.msra.mxu0 0.0
    %159 = vmatprep.subr.mxu0 0.0
    %160 = vmatpush1.msra.mxu0 0.0
    %161 = vmatprep.subr.mxu0 0.0
    %162 = vmatpush1.msra.mxu0 0.0
    %163 = vmatprep.subr.mxu0 0.0
    %164 = vmatpush1.msra.mxu0 0.0
    %165 = vmatprep.subr.mxu0 0.0
    %166 = vmatpush1.msra.mxu0 0.0
    %167 = vmatprep.subr.mxu0 0.0
    %168 = vmatpush1.msra.mxu0 0.0
    %169 = vmatprep.subr.mxu0 0.0
    %170 = vmatpush1.msra.mxu0 0.0
    %171 = vmatprep.subr.mxu0 0.0
    %172 = vmatpush1.msra.mxu0 0.0
    %173 = vmatprep.subr.mxu0 0.0
    %174 = vmatpush1.msra.mxu0 0.0
    %175 = vmatprep.subr.mxu0 0.0
    %176 = vmatpush1.msra.mxu0 0.0
    %177 = vmatprep.subr.mxu0 0.0
    %178 = vmatpush1.msra.mxu0 0.0
    %179 = vmatprep.subr.mxu0 0.0
    %180 = vmatpush1.msra.mxu0 0.0
    %181 = vmatprep.subr.mxu0 0.0
    %182 = vmatpush1.msra.mxu0 0.0
    %183 = vmatprep.subr.mxu0 0.0
    %184 = vmatpush1.msra.mxu0 0.0
    %185 = vmatprep.subr.mxu0 0.0
    %186 = vmatpush1.msra.mxu0 0.0
    %187 = vmatprep.subr.mxu0 0.0
    %188 = vmatpush1.msra.mxu0 0.0
    %189 = vmatprep.subr.mxu0 0.0
    %190 = vmatpush1.msra.mxu0 0.0
    %191 = vmatprep.subr.mxu0 0.0
    %192 = vmatpush1.msra.mxu0 0.0
    %193 = vmatprep.subr.mxu0 0.0
    %194 = vmatpush1.msra.mxu0 0.0
    %195 = vmatprep.subr.mxu0 0.0
    %196 = vmatpush1.msra.mxu0 0.0
    %197 = vmatprep.subr.mxu0 0.0
    %198 = vmatpush1.msra.mxu0 0.0
    %199 = vmatprep.subr.mxu0 0.0
    %200 = vmatpush1.msra.mxu0 0.0
    %201 = vmatprep.subr.mxu0 0.0
    %202 = vmatpush1.msra.mxu0 0.0
    %203 = vmatprep.subr.mxu0 0.0
    %204 = vmatpush1.msra.mxu0 0.0
    %205 = vmatprep.subr.mxu0 0.0
    %206 = vmatpush1.msra.mxu0 0.0
    %207 = vmatprep.mubr.f32.mxu0 0.0
    %208 = vmatmul.mubr.f32.gmra.mrb[0].mxu0 %v141
    %v209 = vpop.f32.mrb[0].mxu0
    %v210 = vadd.f32 %v137, %v209
    %v211 = vpop.f32.mrb[0].mxu0
    %212 = vdwg.mxu0
    %v213 = vmax.f32 %v210, 0.0
    %214 = vst [vmem:[#allocation5] sm:$0xff] %v213
    %v215 = vld [vmem:[#allocation2] sm:$0xff]
    %v216 = vld [vmem:[#allocation2 + $0x8] sm:$0xff]
    %v217 = vld [vmem:[#allocation2 + $0x10] sm:$0xff]
    %v218 = vld [vmem:[#allocation2 + $0x18] sm:$0xff]
    %v219 = vld [vmem:[#allocation2 + $0x20] sm:$0xff]
    %v220 = vld [vmem:[#allocation2 + $0x28] sm:$0xff]
    %v221 = vld [vmem:[#allocation2 + $0x30] sm:$0xff]
    %v222 = vld [vmem:[#allocation2 + $0x38] sm:$0xff]
    %v223 = vld [vmem:[#allocation2 + $0x40] sm:$0xff]
    %v224 = vld [vmem:[#allocation2 + $0x48] sm:$0xff]
    %v225 = vld [vmem:[#allocation2 + $0x50] sm:$0xff]
    %v226 = vld [vmem:[#allocation2 + $0x58] sm:$0xff]
    %v227 = vld [vmem:[#allocation2 + $0x60] sm:$0xff]
    %v228 = vld [vmem:[#allocation2 + $0x68] sm:$0xff]
    %v229 = vld [vmem:[#allocation2 + $0x70] sm:$0xff]
    %v230 = vld [vmem:[#allocation2 + $0x78] sm:$0xff]
    %v231 = vld [vmem:[%s6] sm:$0x1]
    %v233 = vlaneseq
    %v234 = vshrl.u32 %v233, 7
    %v235 = vsub.s32 0, %v234
    %v236 = vrot.slane %v231, %v235
    %238 = vmatprep.subr.mxu0 0.0
    %239 = vmatpush1.msra.mxu0 %v215
    %240 = vmatprep.subr.mxu0 0.0
    %241 = vmatpush1.msra.mxu0 %v216
    %242 = vmatprep.subr.mxu0 0.0
    %243 = vmatpush1.msra.mxu0 %v217
    %244 = vmatprep.subr.mxu0 0.0
    %245 = vmatpush1.msra.mxu0 %v218
    %246 = vmatprep.subr.mxu0 0.0
    %247 = vmatpush1.msra.mxu0 %v219
    %248 = vmatprep.subr.mxu0 0.0
    %249 = vmatpush1.msra.mxu0 %v220
    %250 = vmatprep.subr.mxu0 0.0
    %251 = vmatpush1.msra.mxu0 %v221
    %252 = vmatprep.subr.mxu0 0.0
    %253 = vmatpush1.msra.mxu0 %v222
    %254 = vmatprep.subr.mxu0 0.0
    %255 = vmatpush1.msra.mxu0 %v223
    %256 = vmatprep.subr.mxu0 0.0
    %257 = vmatpush1.msra.mxu0 %v224
    %258 = vmatprep.subr.mxu0 0.0
    %259 = vmatpush1.msra.mxu0 %v225
    %260 = vmatprep.subr.mxu0 0.0
    %261 = vmatpush1.msra.mxu0 %v226
    %262 = vmatprep.subr.mxu0 0.0
    %263 = vmatpush1.msra.mxu0 %v227
    %264 = vmatprep.subr.mxu0 0.0
    %265 = vmatpush1.msra.mxu0 %v228
    %266 = vmatprep.subr.mxu0 0.0
    %267 = vmatpush1.msra.mxu0 %v229
    %268 = vmatprep.subr.mxu0 0.0
    %269 = vmatpush1.msra.mxu0 %v230
    %270 = vmatprep.subr.mxu0 0.0
    %271 = vmatpush1.msra.mxu0 0.0
    %272 = vmatprep.subr.mxu0 0.0
    %273 = vmatpush1.msra.mxu0 0.0
    %274 = vmatprep.subr.mxu0 0.0
    %275 = vmatpush1.msra.mxu0 0.0
    %276 = vmatprep.subr.mxu0 0.0
    %277 = vmatpush1.msra.mxu0 0.0
    %278 = vmatprep.subr.mxu0 0.0
    %279 = vmatpush1.msra.mxu0 0.0
    %280 = vmatprep.subr.mxu0 0.0
    %281 = vmatpush1.msra.mxu0 0.0
    %282 = vmatprep.subr.mxu0 0.0
    %283 = vmatpush1.msra.mxu0 0.0
    %284 = vmatprep.subr.mxu0 0.0
    %285 = vmatpush1.msra.mxu0 0.0
    %286 = vmatprep.subr.mxu0 0.0
    %287 = vmatpush1.msra.mxu0 0.0
    %288 = vmatprep.subr.mxu0 0.0
    %289 = vmatpush1.msra.mxu0 0.0
    %290 = vmatprep.subr.mxu0 0.0
    %291 = vmatpush1.msra.mxu0 0.0
    %292 = vmatprep.subr.mxu0 0.0
    %293 = vmatpush1.msra.mxu0 0.0
    %294 = vmatprep.subr.mxu0 0.0
    %295 = vmatpush1.msra.mxu0 0.0
    %296 = vmatprep.subr.mxu0 0.0
    %297 = vmatpush1.msra.mxu0 0.0
    %298 = vmatprep.subr.mxu0 0.0
    %299 = vmatpush1.msra.mxu0 0.0
    %300 = vmatprep.subr.mxu0 0.0
    %301 = vmatpush1.msra.mxu0 0.0
    %302 = vmatprep.mubr.f32.mxu0 0.0
    %303 = vmatmul.mubr.f32.gmra.mrb[0].mxu0 %v213
    %v304 = vpop.f32.mrb[0].mxu0
    %v305 = vadd.f32 %v236, %v304
    %v306 = vpop.f32.mrb[0].mxu0
    %307 = vdwg.mxu0
    %v308 = vlaneseq
    %v309 = vand.u32 %v308, 127
    %vm310 = vcmp.lt.s32.totalorder %v309, 3
    %v311 = vsel %vm310, %v305, -1e+30
    %312 = vmax.xlane.f32.xlu0 %v311
    %v313 = vpop.xlane.xlu0 %312
    %v314 = vsub.f32 %v305, %v313
    %v315 = vmul.f32 %v314, 1.442695
    %v316 = vpow.pop %v315
    %v317 = vsel %vm310, %v316, 0.0
    %318 = vadd.xlane.f32.xlu0 %v317
    %v319 = vpop.xlane.xlu0 %318
    %v320 = vlog2.pop %v319
    %v321 = vmul.f32 %v320, 0.6931472
    %v322 = vsub.f32 %v314, %v321
    %v323 = vmul.f32 %v53, %v322
    %324 = vadd.xlane.f32.xlu0 %v323
    %v325 = vpop.xlane.xlu0 %324
    %v326 = vrot.slane %v325, 4
    %v327 = vadd.f32 %v325, %v326
    %v328 = vrot.slane %v327, 2
    %v329 = vadd.f32 %v327, %v328
    %v330 = vrot.slane %v329, 1
    %v331 = vadd.f32 %v329, %v330
    %s332 = vtos %v331
    %v333 = vstv %s332
    %v334 = vsub.f32 0.0, %v333
    %v335 = vrcp.pop 8.0
    %v336 = vmul.f32 %v334, %v335
    %337 = vmatprep.subr.mxu0 0.0
    %338 = vmatpush1.xpose.msra.mxu0 %v213
    %339 = vmatprep.subr.mxu0 0.0
    %340 = vmatpush1.xpose.msra.mxu0 0.0
    %341 = vmatprep.subr.mxu0 0.0
    %342 = vmatpush1.xpose.msra.mxu0 0.0
    %343 = vmatprep.subr.mxu0 0.0
    %344 = vmatpush1.xpose.msra.mxu0 0.0
    %345 = vmatprep.subr.mxu0 0.0
    %346 = vmatpush1.xpose.msra.mxu0 0.0
    %347 = vmatprep.subr.mxu0 0.0
    %348 = vmatpush1.xpose.msra.mxu0 0.0
    %349 = vmatprep.subr.mxu0 0.0
    %350 = vmatpush1.xpose.msra.mxu0 0.0
    %351 = vmatprep.subr.mxu0 0.0
    %352 = vmatpush1.xpose.msra.mxu0 0.0
    %353 = vmatprep.subr.mxu0 0.0
    %354 = vmatpush1.xpose.msra.mxu0 0.0
    %355 = vmatprep.subr.mxu0 0.0
    %356 = vmatpush1.xpose.msra.mxu0 0.0
    %357 = vmatprep.subr.mxu0 0.0
    %358 = vmatpush1.xpose.msra.mxu0 0.0
    %359 = vmatprep.subr.mxu0 0.0
    %360 = vmatpush1.xpose.msra.mxu0 0.0
    %361 = vmatprep.subr.mxu0 0.0
    %362 = vmatpush1.xpose.msra.mxu0 0.0
    %363 = vmatprep.subr.mxu0 0.0
    %364 = vmatpush1.xpose.msra.mxu0 0.0
    %365 = vmatprep.subr.mxu0 0.0
    %366 = vmatpush1.xpose.msra.mxu0 0.0
    %367 = vmatprep.subr.mxu0 0.0
    %368 = vmatpush1.xpose.msra.mxu0 0.0
    %369 = vmatprep.subr.mxu0 0.0
    %370 = vmatpush1.xpose.msra.mxu0 0.0
    %371 = vmatprep.subr.mxu0 0.0
    %372 = vmatpush1.xpose.msra.mxu0 0.0
    %373 = vmatprep.subr.mxu0 0.0
    %374 = vmatpush1.xpose.msra.mxu0 0.0
    %375 = vmatprep.subr.mxu0 0.0
    %376 = vmatpush1.xpose.msra.mxu0 0.0
    %377 = vmatprep.subr.mxu0 0.0
    %378 = vmatpush1.xpose.msra.mxu0 0.0
    %379 = vmatprep.subr.mxu0 0.0
    %380 = vmatpush1.xpose.msra.mxu0 0.0
    %381 = vmatprep.subr.mxu0 0.0
    %382 = vmatpush1.xpose.msra.mxu0 0.0
    %383 = vmatprep.subr.mxu0 0.0
    %384 = vmatpush1.xpose.msra.mxu0 0.0
    %385 = vmatprep.subr.mxu0 0.0
    %386 = vmatpush1.xpose.msra.mxu0 0.0
    %387 = vmatprep.subr.mxu0 0.0
    %388 = vmatpush1.xpose.msra.mxu0 0.0
    %389 = vmatprep.subr.mxu0 0.0
    %390 = vmatpush1.xpose.msra.mxu0 0.0
    %391 = vmatprep.subr.mxu0 0.0
    %392 = vmatpush1.xpose.msra.mxu0 0.0
    %393 = vmatprep.subr.mxu0 0.0
    %394 = vmatpush1.xpose.msra.mxu0 0.0
    %395 = vmatprep.subr.mxu0 0.0
    %396 = vmatpush1.xpose.msra.mxu0 0.0
    %397 = vmatprep.subr.mxu0 0.0
    %398 = vmatpush1.xpose.msra.mxu0 0.0
    %399 = vmatprep.subr.mxu0 0.0
    %400 = vmatpush1.xpose.msra.mxu0 0.0
    %401 = vmatprep.mubr.f32.mxu0 0.0
    %402 = vmatmul.mubr.f32.gmra.mrb[0].mxu0 %v213
    %v403 = vpop.f32.mrb[0].mxu0
    %v404 = vadd.f32 0.0, %v403
    %v405 = vpop.f32.mrb[0].mxu0
    %406 = vdwg.mxu0
    %v407 = vmul.f32 %v213, %v213
    %408 = vadd.xlane.f32.xlu0 %v407
    %v409 = vpop.xlane.xlu0 %408
    %410 = vmatprep.subr.mxu0 0.0
    %411 = vmatpush1.xpose.msra.mxu0 %v407
    %412 = vmatprep.subr.mxu0 0.0
    %413 = vmatpush1.xpose.msra.mxu0 0.0
    %414 = vmatprep.subr.mxu0 0.0
    %415 = vmatpush1.xpose.msra.mxu0 0.0
    %416 = vmatprep.subr.mxu0 0.0
    %417 = vmatpush1.xpose.msra.mxu0 0.0
    %418 = vmatprep.subr.mxu0 0.0
    %419 = vmatpush1.xpose.msra.mxu0 0.0
    %420 = vmatprep.subr.mxu0 0.0
    %421 = vmatpush1.xpose.msra.mxu0 0.0
    %422 = vmatprep.subr.mxu0 0.0
    %423 = vmatpush1.xpose.msra.mxu0 0.0
    %424 = vmatprep.subr.mxu0 0.0
    %425 = vmatpush1.xpose.msra.mxu0 0.0
    %426 = vmatprep.subr.mxu0 0.0
    %427 = vmatpush1.xpose.msra.mxu0 0.0
    %428 = vmatprep.subr.mxu0 0.0
    %429 = vmatpush1.xpose.msra.mxu0 0.0
    %430 = vmatprep.subr.mxu0 0.0
    %431 = vmatpush1.xpose.msra.mxu0 0.0
    %432 = vmatprep.subr.mxu0 0.0
    %433 = vmatpush1.xpose.msra.mxu0 0.0
    %434 = vmatprep.subr.mxu0 0.0
    %435 = vmatpush1.xpose.msra.mxu0 0.0
    %436 = vmatprep.subr.mxu0 0.0
    %437 = vmatpush1.xpose.msra.mxu0 0.0
    %438 = vmatprep.subr.mxu0 0.0
    %439 = vmatpush1.xpose.msra.mxu0 0.0
    %440 = vmatprep.subr.mxu0 0.0
    %441 = vmatpush1.xpose.msra.mxu0 0.0
    %442 = vmatprep.subr.mxu0 0.0
    %443 = vmatpush1.xpose.msra.mxu0 0.0
    %444 = vmatprep.subr.mxu0 0.0
    %445 = vmatpush1.xpose.msra.mxu0 0.0
    %446 = vmatprep.subr.mxu0 0.0
    %447 = vmatpush1.xpose.msra.mxu0 0.0
    %448 = vmatprep.subr.mxu0 0.0
    %449 = vmatpush1.xpose.msra.mxu0 0.0
    %450 = vmatprep.subr.mxu0 0.0
    %451 = vmatpush1.xpose.msra.mxu0 0.0
    %452 = vmatprep.subr.mxu0 0.0
    %453 = vmatpush1.xpose.msra.mxu0 0.0
    %454 = vmatprep.subr.mxu0 0.0
    %455 = vmatpush1.xpose.msra.mxu0 0.0
    %456 = vmatprep.subr.mxu0 0.0
    %457 = vmatpush1.xpose.msra.mxu0 0.0
    %458 = vmatprep.subr.mxu0 0.0
    %459 = vmatpush1.xpose.msra.mxu0 0.0
    %460 = vmatprep.subr.mxu0 0.0
    %461 = vmatpush1.xpose.msra.mxu0 0.0
    %462 = vmatprep.subr.mxu0 0.0
    %463 = vmatpush1.xpose.msra.mxu0 0.0
    %464 = vmatprep.subr.mxu0 0.0
    %465 = vmatpush1.xpose.msra.mxu0 0.0
    %466 = vmatprep.subr.mxu0 0.0
    %467 = vmatpush1.xpose.msra.mxu0 0.0
    %468 = vmatprep.subr.mxu0 0.0
    %469 = vmatpush1.xpose.msra.mxu0 0.0
    %470 = vmatprep.subr.mxu0 0.0
    %471 = vmatpush1.xpose.msra.mxu0 0.0
    %472 = vmatprep.subr.mxu0 0.0
    %473 = vmatpush1.xpose.msra.mxu0 0.0
    %474 = vmatprep.mubr.f32.mxu0 0.0
    %475 = vmatmul.mubr.f32.gmra.mrb[0].mxu0 1.0
    %v476 = vpop.f32.mrb[0].mxu0
    %v477 = vadd.f32 0.0, %v476
    %v478 = vpop.f32.mrb[0].mxu0
    %479 = vdwg.mxu0
    %v480 = vmul.f32 %v404, 2.0
    %v481 = vlaneseq
    %v482 = vshrl.u32 %v481, 7
    %v483 = vsub.s32 0, %v482
    %v484 = vrot.slane %v477, %v483
    %v485 = vsub.f32 %v484, %v480
    %v486 = vadd.f32 %v485, %v409
    %v487 = vmax.f32 %v486, 0.0
    %vm488 = vcmp.eq.f32.partialorder %v487, 0.0
    %v489 = vsel %vm488, 1, 0
    %v490 = vcvt.s32.f32 %v489
    %v491 = vmul.f32 %v490, 1e-16
    %v492 = vadd.f32 %v487, %v491
    %v493 = vrsqrt.pop %v492
    %v494 = vmul.f32 %v492, %v493
    %vm495 = vcmp.eq.f32.partialorder %v492, inf
    %v496 = vsel %vm495, %v492, %v494
    %vm497 = vcmp.eq.f32.partialorder %v492, 0.0
    %v498 = vand.u32 %v492, 2147483648
    %v499 = vsel %vm497, %v498, %v496
    %v500 = vsub.f32 1.0, %v490
    %v501 = vmul.f32 %v499, %v500
    %v502 = vlaneseq
    %v503 = vshrl.u32 %v502, 7
    %vm504 = vcmp.eq.s32.totalorder %v503, %v309
    %v505 = vsel %vm504, 1, 0
    %v506 = vcvt.s32.f32 %v505
    %507 = vmatprep.subr.mxu0 0.0
    %508 = vmatpush1.xpose.msra.mxu0 %v53
    %509 = vmatprep.subr.mxu0 0.0
    %510 = vmatpush1.xpose.msra.mxu0 0.0
    %511 = vmatprep.subr.mxu0 0.0
    %512 = vmatpush1.xpose.msra.mxu0 0.0
    %513 = vmatprep.subr.mxu0 0.0
    %514 = vmatpush1.xpose.msra.mxu0 0.0
    %515 = vmatprep.subr.mxu0 0.0
    %516 = vmatpush1.xpose.msra.mxu0 0.0
    %517 = vmatprep.subr.mxu0 0.0
    %518 = vmatpush1.xpose.msra.mxu0 0.0
    %519 = vmatprep.subr.mxu0 0.0
    %520 = vmatpush1.xpose.msra.mxu0 0.0
    %521 = vmatprep.subr.mxu0 0.0
    %522 = vmatpush1.xpose.msra.mxu0 0.0
    %523 = vmatprep.subr.mxu0 0.0
    %524 = vmatpush1.xpose.msra.mxu0 0.0
    %525 = vmatprep.subr.mxu0 0.0
    %526 = vmatpush1.xpose.msra.mxu0 0.0
    %527 = vmatprep.subr.mxu0 0.0
    %528 = vmatpush1.xpose.msra.mxu0 0.0
    %529 = vmatprep.subr.mxu0 0.0
    %530 = vmatpush1.xpose.msra.mxu0 0.0
    %531 = vmatprep.subr.mxu0 0.0
    %532 = vmatpush1.xpose.msra.mxu0 0.0
    %533 = vmatprep.subr.mxu0 0.0
    %534 = vmatpush1.xpose.msra.mxu0 0.0
    %535 = vmatprep.subr.mxu0 0.0
    %536 = vmatpush1.xpose.msra.mxu0 0.0
    %537 = vmatprep.subr.mxu0 0.0
    %538 = vmatpush1.xpose.msra.mxu0 0.0
    %539 = vmatprep.subr.mxu0 0.0
    %540 = vmatpush1.xpose.msra.mxu0 0.0
    %541 = vmatprep.subr.mxu0 0.0
    %542 = vmatpush1.xpose.msra.mxu0 0.0
    %543 = vmatprep.subr.mxu0 0.0
    %544 = vmatpush1.xpose.msra.mxu0 0.0
    %545 = vmatprep.subr.mxu0 0.0
    %546 = vmatpush1.xpose.msra.mxu0 0.0
    %547 = vmatprep.subr.mxu0 0.0
    %548 = vmatpush1.xpose.msra.mxu0 0.0
    %549 = vmatprep.subr.mxu0 0.0
    %550 = vmatpush1.xpose.msra.mxu0 0.0
    %551 = vmatprep.subr.mxu0 0.0
    %552 = vmatpush1.xpose.msra.mxu0 0.0
    %553 = vmatprep.subr.mxu0 0.0
    %554 = vmatpush1.xpose.msra.mxu0 0.0
    %555 = vmatprep.subr.mxu0 0.0
    %556 = vmatpush1.xpose.msra.mxu0 0.0
    %557 = vmatprep.subr.mxu0 0.0
    %558 = vmatpush1.xpose.msra.mxu0 0.0
    %559 = vmatprep.subr.mxu0 0.0
    %560 = vmatpush1.xpose.msra.mxu0 0.0
    %561 = vmatprep.subr.mxu0 0.0
    %562 = vmatpush1.xpose.msra.mxu0 0.0
    %563 = vmatprep.subr.mxu0 0.0
    %564 = vmatpush1.xpose.msra.mxu0 0.0
    %565 = vmatprep.subr.mxu0 0.0
    %566 = vmatpush1.xpose.msra.mxu0 0.0
    %567 = vmatprep.subr.mxu0 0.0
    %568 = vmatpush1.xpose.msra.mxu0 0.0
    %569 = vmatprep.subr.mxu0 0.0
    %570 = vmatpush1.xpose.msra.mxu0 0.0
    %571 = vmatprep.mubr.f32.mxu0 0.0
    %572 = vmatmul.mubr.f32.gmra.mrb[0].mxu0 %v53
    %v573 = vpop.f32.mrb[0].mxu0
    %v574 = vadd.f32 0.0, %v573
    %v575 = vpop.f32.mrb[0].mxu0
    %576 = vdwg.mxu0
    %v577 = vsub.f32 1.0, %v506
    %v578 = vmul.f32 %v574, %v577
    %v579 = vsub.f32 1.0, %v574
    %v580 = vmul.f32 %v578, %v501
    %vm581 = vcmask 64512
    %v582 = vsel %vm581, %v580, -inf
    %583 = vmax.xlane.f32.xlu0 %v582
    %v584 = vpop.xlane.xlu0 %583
    %v585 = vsel %vm581, %v501, -inf
    %586 = vmax.xlane.f32.xlu0 %v585
    %v587 = vpop.xlane.xlu0 %586
    %v588 = vsub.f32 1.0, %v579
    %v589 = vmul.f32 %v587, %v588
    %v590 = vadd.f32 %v501, %v589
    %v591 = vsel %vm581, %v590, inf
    %592 = vmin.xlane.f32.xlu0 %v591
    %v593 = vpop.xlane.xlu0 %592
    %v594 = vsub.f32 %v584, %v593
    %v595 = vmax.f32 %v594, 0.0
    %v596 = vand.u32 2147483647, %v594
    %v597 = vsub.f32 0.0, %v596
    %v598 = vmul.f32 %v597, 1.442695
    %v599 = vpow.pop %v598
    %v600 = vadd.f32 %v599, 1.0
    %v601 = vlog2.pop %v600
    %v602 = vmul.f32 %v601, 0.6931472
    %v603 = vadd.f32 %v595, %v602
    %vm604 = vcmask 7168
    %v605 = vsel %vm604, %v603, 0.0
    %606 = vadd.xlane.f32.xlu0 %v605
    %v607 = vpop.xlane.xlu0 %606
    %v608 = vrot.slane %v607, 4
    %v609 = vadd.f32 %v607, %v608
    %v610 = vrot.slane %v609, 2
    %v611 = vadd.f32 %v609, %v610
    %v612 = vrot.slane %v611, 1
    %v613 = vadd.f32 %v611, %v612
    %s614 = vtos %v613
    %v615 = vstv %s614
    %v616 = vmul.f32 %v615, %v335
    %v617 = vmul.f32 %v616, 0.1
    %v618 = vadd.f32 %v336, %v617
    %619 = vst [vmem:[#allocation6] sm:$0xff] %v305
    %vm620 = vcmp.eq.s32.totalorder %v503, 0
    %vm621 = vcmp.eq.s32.totalorder %v309, 0
    %vm622 = vmand %vm620, %vm621
    %v623 = vsel %vm622, %v618, 0.0
    %vm624 = vcmp.eq.s32.totalorder %v309, 1
    %vm625 = vmand %vm620, %vm624
    %v626 = vsel %vm625, %v336, 0.0
    %v627 = vadd.f32 %v623, %v626
    %vm628 = vcmp.eq.s32.totalorder %v309, 2
    %vm629 = vmand %vm620, %vm628
    %v630 = vsel %vm629, %v616, 0.0
    %v631 = vadd.f32 %v627, %v630
    %632 = vst [vmem:[#allocation6 + $0x8] sm:$0xff] %v631
    // Predicated region
    $region34: #{tpu_custom_call.1} parent=1 // pred_check
      _
    $region35: #{tpu_custom_call.1} parent=1 // pred_check_branch
      %634 = sbr.rel (0) target = $region37
    $region36: #{tpu_custom_call.1} parent=1 // pred_region
      %s636 = ssub.s32 128, 128
      %637 = vsyncadd [#allocation4], %s636
      %s639 = sshll.u32 [#allocation5], 4
      %s640 = int_to_ptr.vmem [resolvable:$true] %s639
      %642 = dma.vmem_to_hbm [thread:$0]  %s640, 128, %s7, [#allocation4]
    $region37: #{tpu_custom_call.1} parent=1 // pred_fallthru
      _
    // Predicated region
    $region38: #{tpu_custom_call.1} parent=1 // pred_check
      _
    $region39: #{tpu_custom_call.1} parent=1 // pred_check_branch
      %644 = sbr.rel (0) target = $region41
    $region40: #{tpu_custom_call.1} parent=1 // pred_region
      %s646 = ssub.s32 256, 256
      %647 = vsyncadd [#allocation7], %s646
      %s648 = sshll.u32 [#allocation6], 4
      %s649 = int_to_ptr.vmem [resolvable:$true] %s648
      %654 = dma.vmem_to_hbm [thread:$0]  %s649, 256, %s8, [#allocation7], 128, 128, 8
    $region41: #{tpu_custom_call.1} parent=1 // pred_fallthru
      _
    // Predicated region
    $region42: #{tpu_custom_call.1} parent=1 // pred_check
      _
    $region43: #{tpu_custom_call.1} parent=1 // pred_check_branch
      %656 = sbr.rel (0) target = $region45
    $region44: #{tpu_custom_call.1} parent=1 // pred_region
      %657 = dma.done [#allocation4], 128
    $region45: #{tpu_custom_call.1} parent=1 // pred_fallthru
      _
    // Predicated region
    $region46: #{tpu_custom_call.1} parent=1 // pred_check
      _
    $region47: #{tpu_custom_call.1} parent=1 // pred_check_branch
      %659 = sbr.rel (0) target = $region49
    $region48: #{tpu_custom_call.1} parent=1 // pred_region
      %660 = dma.done [#allocation7], 256
    $region49: #{tpu_custom_call.1} parent=1 // pred_fallthru
      _
    %661 = vsyncpa [#allocation3], 1
    %662 = vsyncpa [#allocation4], 1
    %663 = vsyncpa [#allocation7], 1

</llo_original>
